<compile_context>
chip_gen: v6e
topology: v6e:2x2x1
jax: 0.10.0
libtpu: 0.0.40
codegen_flags: <defaults>
</compile_context>

<pallas_src>
import jax
import jax.numpy as jnp
from jax.experimental import pallas as pl
from jax.experimental.pallas import tpu as pltpu

LANE = 128      # lane width (last-dim alignment)
SUBLANE = 8     # f32 sublane width (second-to-last-dim alignment)


def _round_up(x: int, m: int) -> int:
    return (x + m - 1) // m * m


# ---------------------------------------------------------------------------
# Kernel: one batch tile [TB, IN] -> [TB, OUT]; weights resident in VMEM.
# ---------------------------------------------------------------------------
def dqn_kernel(x_ref, w1_ref, b1_ref, w2_ref, b2_ref, w3_ref, b3_ref, out_ref):
    x = x_ref[...]                                                      # [TB, IN]
    h1 = jnp.dot(x, w1_ref[...], preferred_element_type=jnp.float32)   # [TB, H1] f32
    h1 = jnp.maximum(h1 + b1_ref[...], 0.0)                            # bias+ReLU f32
    h2 = jnp.dot(h1.astype(w2_ref.dtype), w2_ref[...],
                 preferred_element_type=jnp.float32)                   # [TB, H2] f32
    h2 = jnp.maximum(h2 + b2_ref[...], 0.0)
    out = jnp.dot(h2.astype(w3_ref.dtype), w3_ref[...],
                  preferred_element_type=jnp.float32)                  # [TB, OUT] f32
    out_ref[...] = (out + b3_ref[...]).astype(out_ref.dtype)


# ---------------------------------------------------------------------------
# Wrapper
# ---------------------------------------------------------------------------
def dqn_forward(state, params, n_actions, *, block_batch=512, min_grid_steps=1):
    """state: [B, input_dim] float32.  params: output of pad_params().

    min_grid_steps: set to 2 on dual-TensorCore chips (v7x) so the 'parallel'
    batch axis has work for both cores; leave at 1 on v5e/v6e.
    Returns Q-values of shape [B, n_actions] (float32).
    """
    w1, b1 = params["w1"], params["b1"]
    w2, b2 = params["w2"], params["b2"]
    w3, b3 = params["w3"], params["b3"]

    batch, input_dim = state.shape
    in_p, h1_p = w1.shape
    _, h2_p = w2.shape
    _, out_p = w3.shape

    compute_dtype = w1.dtype
    sub = 16 if compute_dtype == jnp.bfloat16 else SUBLANE

    # Batch tile selection.
    b_aligned = _round_up(batch, sub)
    tb = min(block_batch, b_aligned)
    if min_grid_steps > 1 and b_aligned > sub:
        tb = min(tb, _round_up(pl.cdiv(b_aligned, min_grid_steps), sub))
    tb = _round_up(tb, sub)
    b_pad = _round_up(batch, tb)

    # Pad ONLY the batch dim (and the feature dim up to in_p, which is at most
    # a multiple of 8 -- usually a no-op).  Padded rows are sliced off below.
    if (b_pad, in_p) != (batch, input_dim):
        x = jnp.pad(state, ((0, b_pad - batch), (0, in_p - input_dim)))
    else:
        x = state
    if x.dtype != compute_dtype:
        x = x.astype(compute_dtype)

    grid = (b_pad // tb,)

    def row_spec(shape):       # streams one batch tile per grid step
        return pl.BlockSpec(shape, lambda i: (i, 0))

    def resident_spec(shape):  # same block every step -> stays in VMEM
        return pl.BlockSpec(shape, lambda i: (0, 0))

    itemsize = jnp.dtype(compute_dtype).itemsize
    flops = 2 * b_pad * (in_p * h1_p + h1_p * h2_p + h2_p * out_p)
    bytes_accessed = (
        b_pad * in_p * itemsize                                   # state in
        + (in_p * h1_p + h1_p * h2_p + h2_p * out_p) * itemsize   # weights
        + (h1_p + h2_p + out_p) * 4                               # biases (f32)
        + b_pad * out_p * 4                                       # output (f32)
    )
    cost = pl.CostEstimate(flops=flops, transcendentals=0,
                           bytes_accessed=bytes_accessed)

    out = pl.pallas_call(
        dqn_kernel,
        out_shape=jax.ShapeDtypeStruct((b_pad, out_p), jnp.float32),
        grid=grid,
        in_specs=[
            row_spec((tb, in_p)),          # state tile (feature dim = full dim)
            resident_spec((in_p, h1_p)),   # W1
            resident_spec((1, h1_p)),      # b1 (f32)
            resident_spec((h1_p, h2_p)),   # W2
            resident_spec((1, h2_p)),      # b2 (f32)
            resident_spec((h2_p, out_p)),  # W3
            resident_spec((1, out_p)),     # b3 (f32)
        ],
        out_specs=row_spec((tb, out_p)),   # lane-dense: out_p is a multiple of 128
        compiler_params=pltpu.CompilerParams(
            dimension_semantics=("parallel",)),
        cost_estimate=cost,
    )(x, w1, b1, w2, b2, w3, b3)

    return out[:batch, :n_actions]


# ---------------------------------------------------------------------------
# Parameter init (mimics nn.Linear's U(-1/sqrt(fan_in), 1/sqrt(fan_in)))
# ---------------------------------------------------------------------------
def init_params(key, input_dim, fc1_dims, fc2_dims, n_actions):
    """Logical (unpadded) f32 params, weights pre-transposed to [in, out]."""
    ks = jax.random.split(key, 6)

    def linear(kw, kb, fan_in, fan_out):
        bound = 1.0 / jnp.sqrt(fan_in)
        w = jax.random.uniform(kw, (fan_in, fan_out), jnp.float32, -bound, bound)
        b = jax.random.uniform(kb, (1, fan_out), jnp.float32, -bound, bound)
        return w, b

    w1, b1 = linear(ks[0], ks[1], input_dim, fc1_dims)
    w2, b2 = linear(ks[2], ks[3], fc1_dims, fc2_dims)
    w3, b3 = linear(ks[4], ks[5], fc2_dims, n_actions)
    return {"w1": w1, "b1": b1, "w2": w2, "b2": b2, "w3": w3, "b3": b3}


def pad_params(logical, compute_dtype=jnp.bfloat16):
    """Pad hidden/output dims to 128 lanes, W1 rows to a multiple of 8, and
    pre-cast the weights (once) to the MXU compute dtype.  Biases stay f32."""
    def pad(a, row_mult, col_mult, dtype):
        r = _round_up(a.shape[0], row_mult)
        c = _round_up(a.shape[1], col_mult)
        if (r, c) != a.shape:
            a = jnp.pad(a, ((0, r - a.shape[0]), (0, c - a.shape[1])))
        return a.astype(dtype)

    return {
        "w1": pad(logical["w1"], SUBLANE, LANE, compute_dtype),
        "b1": pad(logical["b1"], 1, LANE, jnp.float32),
        "w2": pad(logical["w2"], LANE, LANE, compute_dtype),
        "b2": pad(logical["b2"], 1, LANE, jnp.float32),
        "w3": pad(logical["w3"], LANE, LANE, compute_dtype),
        "b3": pad(logical["b3"], 1, LANE, jnp.float32),
    }


# ---------------------------------------------------------------------------
# TODO(synk): optimizer (Adam), MSELoss and device placement from the PyTorch
# module are training-time concerns, not part of the forward pass.
# ---------------------------------------------------------------------------
if __name__ == "__main__":
    # Small shapes consistent with the module: obs dim 8, two 32-wide hidden
    # layers, 4 actions, batch 64.
    input_dims = (8,)
    fc1_dims = 32
    fc2_dims = 32
    n_actions = 4
    batch = 64

    key = jax.random.PRNGKey(0)
    k_params, k_state = jax.random.split(key)

    logical = init_params(k_params, input_dims[0], fc1_dims, fc2_dims, n_actions)
    state = jax.random.normal(k_state, (batch, input_dims[0]), jnp.float32)

    # Pure-JAX reference with the logical (unpadded, f32) weights.
    h1 = jnp.maximum(state @ logical["w1"] + logical["b1"], 0.0)
    h2 = jnp.maximum(h1 @ logical["w2"] + logical["b2"], 0.0)
    ref = h2 @ logical["w3"] + logical["b3"]

    # 1) Default path: bf16 weights/activations, single-step grid (v5e/v6e style).
    params_bf16 = pad_params(logical, jnp.bfloat16)
    q_bf16 = dqn_forward(state, params_bf16, n_actions)
    jax.block_until_ready(q_bf16)
    assert q_bf16.shape == (batch, n_actions)
    assert jnp.allclose(q_bf16, ref, atol=1e-1, rtol=1e-1)

    # 2) f32 path with a tiled, 2-step grid (v7x-style min_grid_steps=2).
    params_f32 = pad_params(logical, jnp.float32)
    q_f32 = dqn_forward(state, params_f32, n_actions,
                        block_batch=32, min_grid_steps=2)
    jax.block_until_ready(q_f32)
    assert q_f32.shape == (batch, n_actions)
    assert jnp.allclose(q_f32, ref, atol=1e-5, rtol=1e-5)

    print("KERNEL_OK")
</pallas_src>

<mosaic_0001>
module attributes {stable_mosaic.version = 11 : i64} {
  func.func @dqn_kernel(%arg0: i32, %arg1: memref<64x8xbf16, #tpu.memory_space<vmem>>, %arg2: memref<8x128xbf16, #tpu.memory_space<vmem>>, %arg3: memref<1x128xf32, #tpu.memory_space<vmem>>, %arg4: memref<128x128xbf16, #tpu.memory_space<vmem>>, %arg5: memref<1x128xf32, #tpu.memory_space<vmem>>, %arg6: memref<128x128xbf16, #tpu.memory_space<vmem>>, %arg7: memref<1x128xf32, #tpu.memory_space<vmem>>, %arg8: memref<64x128xf32, #tpu.memory_space<vmem>>) attributes {dimension_semantics = [#tpu.dimension_semantics<parallel>], iteration_bounds = array<i64: 1>, scalar_prefetch = 0 : i64, scratch_operands = 0 : i64, tpu.core_type = #tpu.core_type<tc>, window_params = [{transform_indices = @transform_0, window_bounds = array<i64: 64, 8>}, {pipeline_mode = #tpu.pipeline_mode<synchronous>, transform_indices = @transform_1, window_bounds = array<i64: 8, 128>}, {pipeline_mode = #tpu.pipeline_mode<synchronous>, transform_indices = @transform_2, window_bounds = array<i64: 1, 128>}, {pipeline_mode = #tpu.pipeline_mode<synchronous>, transform_indices = @transform_3, window_bounds = array<i64: 128, 128>}, {pipeline_mode = #tpu.pipeline_mode<synchronous>, transform_indices = @transform_4, window_bounds = array<i64: 1, 128>}, {pipeline_mode = #tpu.pipeline_mode<synchronous>, transform_indices = @transform_5, window_bounds = array<i64: 128, 128>}, {pipeline_mode = #tpu.pipeline_mode<synchronous>, transform_indices = @transform_6, window_bounds = array<i64: 1, 128>}, {transform_indices = @transform_7, window_bounds = array<i64: 64, 128>}]} {
    %c0 = arith.constant 0 : index
    %c0_0 = arith.constant 0 : index
    %0 = vector.load %arg1[%c0, %c0_0] : memref<64x8xbf16, #tpu.memory_space<vmem>>, vector<64x8xbf16>
    %c0_1 = arith.constant 0 : index
    %c0_2 = arith.constant 0 : index
    %1 = vector.load %arg2[%c0_1, %c0_2] : memref<8x128xbf16, #tpu.memory_space<vmem>>, vector<8x128xbf16>
    %cst = arith.constant dense<0.000000e+00> : vector<64x128xf32>
    %2 = tpu.matmul %0, %1, %cst {dimension_numbers = #tpu.dot_dimension_numbers<[1], [0], [0], [1], [0, 0, 1, 1], [], []>} : vector<64x8xbf16>, vector<8x128xbf16>, vector<64x128xf32> -> vector<64x128xf32>
    %c0_3 = arith.constant 0 : index
    %c0_4 = arith.constant 0 : index
    %3 = vector.load %arg3[%c0_3, %c0_4] : memref<1x128xf32, #tpu.memory_space<vmem>>, vector<1x128xf32>
    %4 = vector.broadcast %3 : vector<1x128xf32> to vector<64x128xf32>
    %5 = arith.addf %2, %4 : vector<64x128xf32>
    %cst_5 = arith.constant 0.000000e+00 : f32
    %6 = vector.broadcast %cst_5 : f32 to vector<64x128xf32>
    %7 = arith.maximumf %5, %6 : vector<64x128xf32>
    %8 = arith.truncf %7 : vector<64x128xf32> to vector<64x128xbf16>
    %c0_6 = arith.constant 0 : index
    %c0_7 = arith.constant 0 : index
    %9 = vector.load %arg4[%c0_6, %c0_7] : memref<128x128xbf16, #tpu.memory_space<vmem>>, vector<128x128xbf16>
    %cst_8 = arith.constant dense<0.000000e+00> : vector<64x128xf32>
    %10 = tpu.matmul %8, %9, %cst_8 {dimension_numbers = #tpu.dot_dimension_numbers<[1], [0], [0], [1], [0, 0, 1, 1], [], []>} : vector<64x128xbf16>, vector<128x128xbf16>, vector<64x128xf32> -> vector<64x128xf32>
    %c0_9 = arith.constant 0 : index
    %c0_10 = arith.constant 0 : index
    %11 = vector.load %arg5[%c0_9, %c0_10] : memref<1x128xf32, #tpu.memory_space<vmem>>, vector<1x128xf32>
    %12 = vector.broadcast %11 : vector<1x128xf32> to vector<64x128xf32>
    %13 = arith.addf %10, %12 : vector<64x128xf32>
    %cst_11 = arith.constant 0.000000e+00 : f32
    %14 = vector.broadcast %cst_11 : f32 to vector<64x128xf32>
    %15 = arith.maximumf %13, %14 : vector<64x128xf32>
    %16 = arith.truncf %15 : vector<64x128xf32> to vector<64x128xbf16>
    %c0_12 = arith.constant 0 : index
    %c0_13 = arith.constant 0 : index
    %17 = vector.load %arg6[%c0_12, %c0_13] : memref<128x128xbf16, #tpu.memory_space<vmem>>, vector<128x128xbf16>
    %cst_14 = arith.constant dense<0.000000e+00> : vector<64x128xf32>
    %18 = tpu.matmul %16, %17, %cst_14 {dimension_numbers = #tpu.dot_dimension_numbers<[1], [0], [0], [1], [0, 0, 1, 1], [], []>} : vector<64x128xbf16>, vector<128x128xbf16>, vector<64x128xf32> -> vector<64x128xf32>
    %c0_15 = arith.constant 0 : index
    %c0_16 = arith.constant 0 : index
    %19 = vector.load %arg7[%c0_15, %c0_16] : memref<1x128xf32, #tpu.memory_space<vmem>>, vector<1x128xf32>
    %20 = vector.broadcast %19 : vector<1x128xf32> to vector<64x128xf32>
    %21 = arith.addf %18, %20 : vector<64x128xf32>
    %c0_17 = arith.constant 0 : index
    %c0_18 = arith.constant 0 : index
    %22 = vector.load %arg8[%c0_17, %c0_18] : memref<64x128xf32, #tpu.memory_space<vmem>>, vector<64x128xf32>
    tpu.vector_store %arg8[%c0_17, %c0_18], %21 {strides = array<i32>} : memref<64x128xf32, #tpu.memory_space<vmem>>, vector<64x128xf32>,
    return
  }
  func.func @transform_0(%arg0: i32) -> (i32, i32) {
    %c0_i32 = arith.constant 0 : i32
    %c0_i32_0 = arith.constant 0 : i32
    return %arg0, %c0_i32 : i32, i32
  }
  func.func @transform_1(%arg0: i32) -> (i32, i32) {
    %c0_i32 = arith.constant 0 : i32
    %c0_i32_0 = arith.constant 0 : i32
    %c0_i32_1 = arith.constant 0 : i32
    return %c0_i32, %c0_i32_0 : i32, i32
  }
  func.func @transform_2(%arg0: i32) -> (i32, i32) {
    %c0_i32 = arith.constant 0 : i32
    %c0_i32_0 = arith.constant 0 : i32
    %c0_i32_1 = arith.constant 0 : i32
    return %c0_i32, %c0_i32_0 : i32, i32
  }
  func.func @transform_3(%arg0: i32) -> (i32, i32) {
    %c0_i32 = arith.constant 0 : i32
    %c0_i32_0 = arith.constant 0 : i32
    %c0_i32_1 = arith.constant 0 : i32
    return %c0_i32, %c0_i32_0 : i32, i32
  }
  func.func @transform_4(%arg0: i32) -> (i32, i32) {
    %c0_i32 = arith.constant 0 : i32
    %c0_i32_0 = arith.constant 0 : i32
    %c0_i32_1 = arith.constant 0 : i32
    return %c0_i32, %c0_i32_0 : i32, i32
  }
  func.func @transform_5(%arg0: i32) -> (i32, i32) {
    %c0_i32 = arith.constant 0 : i32
    %c0_i32_0 = arith.constant 0 : i32
    %c0_i32_1 = arith.constant 0 : i32
    return %c0_i32, %c0_i32_0 : i32, i32
  }
  func.func @transform_6(%arg0: i32) -> (i32, i32) {
    %c0_i32 = arith.constant 0 : i32
    %c0_i32_0 = arith.constant 0 : i32
    %c0_i32_1 = arith.constant 0 : i32
    return %c0_i32, %c0_i32_0 : i32, i32
  }
  func.func @transform_7(%arg0: i32) -> (i32, i32) {
    %c0_i32 = arith.constant 0 : i32
    %c0_i32_0 = arith.constant 0 : i32
    return %arg0, %c0_i32 : i32, i32
  }
}

</mosaic_0001>

<llo_original>
// kernel: tpu_custom_call.1
$region0: #{tpu_custom_call.1}
  #allocation0 [shape = 'u32[]', space=smem, size = 0x4, offset = 0x4, fixed_abs, tag = 'smem constant byte address 0x4 - core index']
  #allocation1 [shape = 'u32[144,128]{1,0:T(1,128)}', space=vmem, size = 0x12000, scoped, tag = 'internal scratch']
  %s0 = inlined_call_operand.vmem [shape: bf16[64,8], index: 0, kind: input, shape index: {}]
  %s1 = inlined_call_operand.vmem [shape: bf16[8,128], index: 1, kind: input, shape index: {}]
  %s2 = inlined_call_operand.vmem [shape: f32[1,128], index: 2, kind: input, shape index: {}]
  %s3 = inlined_call_operand.hbm [shape: bf16[128,128], index: 3, kind: input, shape index: {}]
  %s4 = inlined_call_operand.vmem [shape: f32[1,128], index: 4, kind: input, shape index: {}]
  %s5 = inlined_call_operand.hbm [shape: bf16[128,128], index: 5, kind: input, shape index: {}]
  %s6 = inlined_call_operand.vmem [shape: f32[1,128], index: 6, kind: input, shape index: {}]
  %s7 = inlined_call_operand.hbm [shape: f32[64,128], index: 7, kind: output, shape index: {}]
  %s8 = sld [smem:[#allocation0]]
  $region46: #{tpu_custom_call.1} parent=0
    _
  %s10 = ssub.s32 1, %s8
  %s11 = scalar_select 0, %s10, %s8
  $region1: #{tpu_custom_call.1} parent=0
    #allocation2 [shape = 'u8[32768]{0}', space=vmem, size = 0x8000, scoped, tag = 'input window, operand 3, single buffered']
    #allocation3 [shape = 's32[1]{0}', space=sflag, size = 0x4, scoped, tag = 'scoped memory for tpu_custom_call.1']
    #allocation4 [shape = 's32[1]{0}', space=sflag, size = 0x4, scoped, tag = 'scoped memory for tpu_custom_call.1']
    #allocation5 [shape = 'u8[32768]{0}', space=vmem, size = 0x8000, scoped, tag = 'input window, operand 5, single buffered']
    #allocation6 [shape = 's32[1]{0}', space=sflag, size = 0x4, scoped, tag = 'scoped memory for tpu_custom_call.1']
    #allocation7 [shape = 'u8[32768]{0}', space=vmem, size = 0x8000, scoped, tag = 'output window, operand 0, single buffered']
    %12 = vsyncpa [#allocation3], 0
    %13 = vsyncpa [#allocation6], 0
    %14 = vsyncpa [#allocation4], 0
    // Predicated region
    $region2: #{tpu_custom_call.1} parent=1 // pred_check
      _
    $region3: #{tpu_custom_call.1} parent=1 // pred_check_branch
      %16 = sbr.rel (0) target = $region5
    $region4: #{tpu_custom_call.1} parent=1 // pred_region
      _
    $region5: #{tpu_custom_call.1} parent=1 // pred_fallthru
      _
    // Predicated region
    $region6: #{tpu_custom_call.1} parent=1 // pred_check
      _
    $region7: #{tpu_custom_call.1} parent=1 // pred_check_branch
      %18 = sbr.rel (0) target = $region9
    $region8: #{tpu_custom_call.1} parent=1 // pred_region
      _
    $region9: #{tpu_custom_call.1} parent=1 // pred_fallthru
      _
    // Predicated region
    $region10: #{tpu_custom_call.1} parent=1 // pred_check
      _
    $region11: #{tpu_custom_call.1} parent=1 // pred_check_branch
      %20 = sbr.rel (0) target = $region13
    $region12: #{tpu_custom_call.1} parent=1 // pred_region
      _
    $region13: #{tpu_custom_call.1} parent=1 // pred_fallthru
      _
    // Predicated region
    $region14: #{tpu_custom_call.1} parent=1 // pred_check
      _
    $region15: #{tpu_custom_call.1} parent=1 // pred_check_branch
      %22 = sbr.rel (0) target = $region17
    $region16: #{tpu_custom_call.1} parent=1 // pred_region
      %s24 = ssub.s32 1024, 1024
      %25 = vsyncadd [#allocation3], %s24
      %s26 = sshll.u32 [#allocation2], 4
      %s27 = int_to_ptr.vmem [resolvable:$true] %s26
      %32 = dma.hbm_to_vmem [thread:$0]  %s3, 1024, %s27, [#allocation3], 64, 64, 4
    $region17: #{tpu_custom_call.1} parent=1 // pred_fallthru
      _
    // Predicated region
    $region18: #{tpu_custom_call.1} parent=1 // pred_check
      _
    $region19: #{tpu_custom_call.1} parent=1 // pred_check_branch
      %34 = sbr.rel (0) target = $region21
    $region20: #{tpu_custom_call.1} parent=1 // pred_region
      _
    $region21: #{tpu_custom_call.1} parent=1 // pred_fallthru
      _
    // Predicated region
    $region22: #{tpu_custom_call.1} parent=1 // pred_check
      _
    $region23: #{tpu_custom_call.1} parent=1 // pred_check_branch
      %36 = sbr.rel (0) target = $region25
    $region24: #{tpu_custom_call.1} parent=1 // pred_region
      %s38 = ssub.s32 1024, 1024
      %39 = vsyncadd [#allocation6], %s38
      %s40 = sshll.u32 [#allocation5], 4
      %s41 = int_to_ptr.vmem [resolvable:$true] %s40
      %46 = dma.hbm_to_vmem [thread:$0]  %s5, 1024, %s41, [#allocation6], 64, 64, 4
    $region25: #{tpu_custom_call.1} parent=1 // pred_fallthru
      _
    // Predicated region
    $region26: #{tpu_custom_call.1} parent=1 // pred_check
      _
    $region27: #{tpu_custom_call.1} parent=1 // pred_check_branch
      %48 = sbr.rel (0) target = $region29
    $region28: #{tpu_custom_call.1} parent=1 // pred_region
      _
    $region29: #{tpu_custom_call.1} parent=1 // pred_fallthru
      _
    // Predicated region
    $region30: #{tpu_custom_call.1} parent=1 // pred_check
      _
    $region31: #{tpu_custom_call.1} parent=1 // pred_check_branch
      %50 = sbr.rel (0) target = $region33
    $region32: #{tpu_custom_call.1} parent=1 // pred_region
      %51 = dma.done [#allocation3], 1024
    $region33: #{tpu_custom_call.1} parent=1 // pred_fallthru
      _
    // Predicated region
    $region34: #{tpu_custom_call.1} parent=1 // pred_check
      _
    $region35: #{tpu_custom_call.1} parent=1 // pred_check_branch
      %53 = sbr.rel (0) target = $region37
    $region36: #{tpu_custom_call.1} parent=1 // pred_region
      %54 = dma.done [#allocation6], 1024
    $region37: #{tpu_custom_call.1} parent=1 // pred_fallthru
      _
    %v56 = vld [vmem:[%s0] sm:$0xf]
    %v57 = vld [vmem:[%s0 + $0x4] sm:$0xf]
    %v58 = vld [vmem:[%s0 + $0x8] sm:$0xf]
    %v59 = vld [vmem:[%s0 + $0xc] sm:$0xf]
    %v60 = vld [vmem:[%s0 + $0x10] sm:$0xf]
    %v61 = vld [vmem:[%s0 + $0x14] sm:$0xf]
    %v62 = vld [vmem:[%s0 + $0x18] sm:$0xf]
    %v63 = vld [vmem:[%s0 + $0x1c] sm:$0xf]
    %v64 = vld [vmem:[%s1] sm:$0xf]
    %v65 = vld [vmem:[%s2] sm:$0x1]
    %v67 = vlaneseq
    %v68 = vshrl.u32 %v67, 7
    %v69 = vsub.s32 0, %v68
    %v70 = vrot.slane %v65, %v69
    %v80 = vunpack.c.l.b16 %v56
    %v81 = vunpack.c.l.b16 %v57
    %v82 = vunpack.c.l.b16 %v58
    %v83 = vunpack.c.l.b16 %v59
    %v84 = vunpack.c.l.b16 %v60
    %v85 = vunpack.c.l.b16 %v61
    %v86 = vunpack.c.l.b16 %v62
    %v87 = vunpack.c.l.b16 %v63
    %v88 = vpack.c.b16 %v81, %v80
    %v89 = vpack.c.b16 %v83, %v82
    %v90 = vpack.c.b16 %v85, %v84
    %v91 = vpack.c.b16 %v87, %v86
    %vm92 = vcmask 64512
    %v94 = vsel %vm92, %v88, 0
    %v97 = vsel %vm92, %v89, 0
    %v100 = vsel %vm92, %v90, 0
    %v103 = vsel %vm92, %v91, 0
    %vm105 = vcmask 1043456
    %v107 = vsel %vm105, %v64, 0
    %109 = vmatprep.subr.bf16.mxu0 0
    %110 = vmatpush1.bf16.msra.mxu0 0
    %111 = vmatprep.subr.bf16.mxu0 0
    %112 = vmatpush1.bf16.msra.mxu0 0
    %113 = vmatprep.subr.bf16.mxu0 0
    %114 = vmatpush1.bf16.msra.mxu0 0
    %115 = vmatprep.subr.bf16.mxu0 0
    %116 = vmatpush1.bf16.msra.mxu0 0
    %117 = vmatprep.subr.bf16.mxu0 0
    %118 = vmatpush1.bf16.msra.mxu0 0
    %119 = vmatprep.subr.bf16.mxu0 0
    %120 = vmatpush1.bf16.msra.mxu0 0
    %121 = vmatprep.subr.bf16.mxu0 0
    %122 = vmatpush1.bf16.msra.mxu0 0
    %123 = vmatprep.subr.bf16.mxu0 0
    %124 = vmatpush1.bf16.msra.mxu0 %v107
    %125 = vmatprep.subr.bf16.mxu0 0
    %126 = vmatpush2.bf16.msra.mxu0 0
    %127 = vmatprep.subr.bf16.mxu0 0
    %128 = vmatpush2.bf16.msra.mxu0 0
    %129 = vmatprep.subr.bf16.mxu0 0
    %130 = vmatpush2.bf16.msra.mxu0 0
    %131 = vmatprep.subr.bf16.mxu0 0
    %132 = vmatpush2.bf16.msra.mxu0 0
    %133 = vmatprep.subr.bf16.mxu0 0
    %134 = vmatpush2.bf16.msra.mxu0 0
    %135 = vmatprep.subr.bf16.mxu0 0
    %136 = vmatpush2.bf16.msra.mxu0 0
    %137 = vmatprep.subr.bf16.mxu0 0
    %138 = vmatpush2.bf16.msra.mxu0 0
    %139 = vmatprep.subr.bf16.mxu0 0
    %140 = vmatpush2.bf16.msra.mxu0 0
    %141 = vmatprep.mubr.bf16.mxu0 0
    %142 = vmatmul.mubr.bf16.gmra.mxu0 %v94
    %v143 = vpop.f32.mrf.mxu0
    %v144 = vadd.f32 %v70, %v143
    %v145 = vpop.f32.mrf.mxu0
    %v146 = vpop.f32.mrf.mxu0
    %v147 = vadd.f32 %v70, %v146
    %v148 = vpop.f32.mrf.mxu0
    %149 = vmatprep.mubr.bf16.mxu0 0
    %150 = vmatmul.mubr.bf16.gmra.mxu0 %v97
    %v151 = vpop.f32.mrf.mxu0
    %v152 = vadd.f32 %v70, %v151
    %v153 = vpop.f32.mrf.mxu0
    %v154 = vpop.f32.mrf.mxu0
    %v155 = vadd.f32 %v70, %v154
    %v156 = vpop.f32.mrf.mxu0
    %157 = vmatprep.mubr.bf16.mxu0 0
    %158 = vmatmul.mubr.bf16.gmra.mxu0 %v100
    %v159 = vpop.f32.mrf.mxu0
    %v160 = vadd.f32 %v70, %v159
    %v161 = vpop.f32.mrf.mxu0
    %v162 = vpop.f32.mrf.mxu0
    %v163 = vadd.f32 %v70, %v162
    %v164 = vpop.f32.mrf.mxu0
    %165 = vmatprep.mubr.bf16.mxu0 0
    %166 = vmatmul.mubr.bf16.gmra.mxu0 %v103
    %v167 = vpop.f32.mrf.mxu0
    %v168 = vadd.f32 %v70, %v167
    %v169 = vpop.f32.mrf.mxu0
    %v170 = vpop.f32.mrf.mxu0
    %v171 = vadd.f32 %v70, %v170
    %v172 = vpop.f32.mrf.mxu0
    %173 = vdwg.mxu0
    %v174 = vmax.f32 %v144, 0.0
    %v175 = vmax.f32 %v147, 0.0
    %v176 = vmax.f32 %v152, 0.0
    %v177 = vmax.f32 %v155, 0.0
    %v178 = vmax.f32 %v160, 0.0
    %v179 = vmax.f32 %v163, 0.0
    %v180 = vmax.f32 %v168, 0.0
    %v181 = vmax.f32 %v171, 0.0
    %v182 = vpack.c.bf16 %v175, %v174
    %v183 = vpack.c.bf16 %v177, %v176
    %v184 = vpack.c.bf16 %v179, %v178
    %v185 = vpack.c.bf16 %v181, %v180
    %v186 = vld [vmem:[#allocation2] sm:$0xf]
    %v187 = vld [vmem:[#allocation2 + $0x4] sm:$0xf]
    %v188 = vld [vmem:[#allocation2 + $0x8] sm:$0xf]
    %v189 = vld [vmem:[#allocation2 + $0xc] sm:$0xf]
    %v190 = vld [vmem:[#allocation2 + $0x10] sm:$0xf]
    %v191 = vld [vmem:[#allocation2 + $0x14] sm:$0xf]
    %v192 = vld [vmem:[#allocation2 + $0x18] sm:$0xf]
    %v193 = vld [vmem:[#allocation2 + $0x1c] sm:$0xf]
    %v194 = vld [vmem:[#allocation2 + $0x20] sm:$0xf]
    %v195 = vld [vmem:[#allocation2 + $0x24] sm:$0xf]
    %v196 = vld [vmem:[#allocation2 + $0x28] sm:$0xf]
    %v197 = vld [vmem:[#allocation2 + $0x2c] sm:$0xf]
    %v198 = vld [vmem:[#allocation2 + $0x30] sm:$0xf]
    %v199 = vld [vmem:[#allocation2 + $0x34] sm:$0xf]
    %v200 = vld [vmem:[#allocation2 + $0x38] sm:$0xf]
    %v201 = vld [vmem:[#allocation2 + $0x3c] sm:$0xf]
    %v202 = vld [vmem:[%s4] sm:$0x1]
    %v204 = vlaneseq
    %v205 = vshrl.u32 %v204, 7
    %v206 = vsub.s32 0, %v205
    %v207 = vrot.slane %v202, %v206
    %v225 = vunpack.c.l.b16 %v186
    %v226 = vunpack.c.l.b16 %v187
    %v227 = vunpack.c.l.b16 %v188
    %v228 = vunpack.c.l.b16 %v189
    %v229 = vunpack.c.l.b16 %v190
    %v230 = vunpack.c.l.b16 %v191
    %v231 = vunpack.c.l.b16 %v192
    %v232 = vunpack.c.l.b16 %v193
    %v233 = vunpack.c.l.b16 %v194
    %v234 = vunpack.c.l.b16 %v195
    %v235 = vunpack.c.l.b16 %v196
    %v236 = vunpack.c.l.b16 %v197
    %v237 = vunpack.c.l.b16 %v198
    %v238 = vunpack.c.l.b16 %v199
    %v239 = vunpack.c.l.b16 %v200
    %v240 = vunpack.c.l.b16 %v201
    %v241 = vpack.c.b16 %v226, %v225
    %v242 = vpack.c.b16 %v228, %v227
    %v243 = vpack.c.b16 %v230, %v229
    %v244 = vpack.c.b16 %v232, %v231
    %v245 = vpack.c.b16 %v234, %v233
    %v246 = vpack.c.b16 %v236, %v235
    %v247 = vpack.c.b16 %v238, %v237
    %v248 = vpack.c.b16 %v240, %v239
    %257 = vmatprep.subr.bf16.mxu0 0
    %258 = vmatpush1.bf16.msra.mxu0 %v248
    %259 = vmatprep.subr.bf16.mxu0 0
    %260 = vmatpush1.bf16.msra.mxu0 %v247
    %261 = vmatprep.subr.bf16.mxu0 0
    %262 = vmatpush1.bf16.msra.mxu0 %v246
    %263 = vmatprep.subr.bf16.mxu0 0
    %264 = vmatpush1.bf16.msra.mxu0 %v245
    %265 = vmatprep.subr.bf16.mxu0 0
    %266 = vmatpush1.bf16.msra.mxu0 %v244
    %267 = vmatprep.subr.bf16.mxu0 0
    %268 = vmatpush1.bf16.msra.mxu0 %v243
    %269 = vmatprep.subr.bf16.mxu0 0
    %270 = vmatpush1.bf16.msra.mxu0 %v242
    %271 = vmatprep.subr.bf16.mxu0 0
    %272 = vmatpush1.bf16.msra.mxu0 %v241
    %273 = vmatprep.subr.bf16.mxu0 0
    %274 = vmatpush2.bf16.msra.mxu0 0
    %275 = vmatprep.subr.bf16.mxu0 0
    %276 = vmatpush2.bf16.msra.mxu0 0
    %277 = vmatprep.subr.bf16.mxu0 0
    %278 = vmatpush2.bf16.msra.mxu0 0
    %279 = vmatprep.subr.bf16.mxu0 0
    %280 = vmatpush2.bf16.msra.mxu0 0
    %281 = vmatprep.subr.bf16.mxu0 0
    %282 = vmatpush2.bf16.msra.mxu0 0
    %283 = vmatprep.subr.bf16.mxu0 0
    %284 = vmatpush2.bf16.msra.mxu0 0
    %285 = vmatprep.subr.bf16.mxu0 0
    %286 = vmatpush2.bf16.msra.mxu0 0
    %287 = vmatprep.subr.bf16.mxu0 0
    %288 = vmatpush2.bf16.msra.mxu0 0
    %289 = vmatprep.mubr.bf16.mxu0 0
    %290 = vmatmul.mubr.bf16.gmra.mxu0 %v182
    %v291 = vpop.f32.mrf.mxu0
    %v292 = vadd.f32 %v207, %v291
    %v293 = vpop.f32.mrf.mxu0
    %v294 = vpop.f32.mrf.mxu0
    %v295 = vadd.f32 %v207, %v294
    %v296 = vpop.f32.mrf.mxu0
    %297 = vmatprep.mubr.bf16.mxu0 0
    %298 = vmatmul.mubr.bf16.gmra.mxu0 %v183
    %v299 = vpop.f32.mrf.mxu0
    %v300 = vadd.f32 %v207, %v299
    %v301 = vpop.f32.mrf.mxu0
    %v302 = vpop.f32.mrf.mxu0
    %v303 = vadd.f32 %v207, %v302
    %v304 = vpop.f32.mrf.mxu0
    %305 = vmatprep.mubr.bf16.mxu0 0
    %306 = vmatmul.mubr.bf16.gmra.mxu0 %v184
    %v307 = vpop.f32.mrf.mxu0
    %v308 = vadd.f32 %v207, %v307
    %v309 = vpop.f32.mrf.mxu0
    %v310 = vpop.f32.mrf.mxu0
    %v311 = vadd.f32 %v207, %v310
    %v312 = vpop.f32.mrf.mxu0
    %313 = vmatprep.mubr.bf16.mxu0 0
    %314 = vmatmul.mubr.bf16.gmra.mxu0 %v185
    %v315 = vpop.f32.mrf.mxu0
    %v316 = vadd.f32 %v207, %v315
    %v317 = vpop.f32.mrf.mxu0
    %v318 = vpop.f32.mrf.mxu0
    %v319 = vadd.f32 %v207, %v318
    %v320 = vpop.f32.mrf.mxu0
    %321 = vdwg.mxu0
    %v322 = vmax.f32 %v292, 0.0
    %v323 = vmax.f32 %v295, 0.0
    %v324 = vmax.f32 %v300, 0.0
    %v325 = vmax.f32 %v303, 0.0
    %v326 = vmax.f32 %v308, 0.0
    %v327 = vmax.f32 %v311, 0.0
    %v328 = vmax.f32 %v316, 0.0
    %v329 = vmax.f32 %v319, 0.0
    %v330 = vpack.c.bf16 %v323, %v322
    %v331 = vpack.c.bf16 %v325, %v324
    %v332 = vpack.c.bf16 %v327, %v326
    %v333 = vpack.c.bf16 %v329, %v328
    %v334 = vld [vmem:[#allocation5] sm:$0xf]
    %v335 = vld [vmem:[#allocation5 + $0x4] sm:$0xf]
    %v336 = vld [vmem:[#allocation5 + $0x8] sm:$0xf]
    %v337 = vld [vmem:[#allocation5 + $0xc] sm:$0xf]
    %v338 = vld [vmem:[#allocation5 + $0x10] sm:$0xf]
    %v339 = vld [vmem:[#allocation5 + $0x14] sm:$0xf]
    %v340 = vld [vmem:[#allocation5 + $0x18] sm:$0xf]
    %v341 = vld [vmem:[#allocation5 + $0x1c] sm:$0xf]
    %v342 = vld [vmem:[#allocation5 + $0x20] sm:$0xf]
    %v343 = vld [vmem:[#allocation5 + $0x24] sm:$0xf]
    %v344 = vld [vmem:[#allocation5 + $0x28] sm:$0xf]
    %v345 = vld [vmem:[#allocation5 + $0x2c] sm:$0xf]
    %v346 = vld [vmem:[#allocation5 + $0x30] sm:$0xf]
    %v347 = vld [vmem:[#allocation5 + $0x34] sm:$0xf]
    %v348 = vld [vmem:[#allocation5 + $0x38] sm:$0xf]
    %v349 = vld [vmem:[#allocation5 + $0x3c] sm:$0xf]
    %v350 = vld [vmem:[%s6] sm:$0x1]
    %v352 = vlaneseq
    %v353 = vshrl.u32 %v352, 7
    %v354 = vsub.s32 0, %v353
    %v355 = vrot.slane %v350, %v354
    %v373 = vunpack.c.l.b16 %v334
    %v374 = vunpack.c.l.b16 %v335
    %v375 = vunpack.c.l.b16 %v336
    %v376 = vunpack.c.l.b16 %v337
    %v377 = vunpack.c.l.b16 %v338
    %v378 = vunpack.c.l.b16 %v339
    %v379 = vunpack.c.l.b16 %v340
    %v380 = vunpack.c.l.b16 %v341
    %v381 = vunpack.c.l.b16 %v342
    %v382 = vunpack.c.l.b16 %v343
    %v383 = vunpack.c.l.b16 %v344
    %v384 = vunpack.c.l.b16 %v345
    %v385 = vunpack.c.l.b16 %v346
    %v386 = vunpack.c.l.b16 %v347
    %v387 = vunpack.c.l.b16 %v348
    %v388 = vunpack.c.l.b16 %v349
    %v389 = vpack.c.b16 %v374, %v373
    %v390 = vpack.c.b16 %v376, %v375
    %v391 = vpack.c.b16 %v378, %v377
    %v392 = vpack.c.b16 %v380, %v379
    %v393 = vpack.c.b16 %v382, %v381
    %v394 = vpack.c.b16 %v384, %v383
    %v395 = vpack.c.b16 %v386, %v385
    %v396 = vpack.c.b16 %v388, %v387
    %405 = vmatprep.subr.bf16.mxu0 0
    %406 = vmatpush1.bf16.msra.mxu0 %v396
    %407 = vmatprep.subr.bf16.mxu0 0
    %408 = vmatpush1.bf16.msra.mxu0 %v395
    %409 = vmatprep.subr.bf16.mxu0 0
    %410 = vmatpush1.bf16.msra.mxu0 %v394
    %411 = vmatprep.subr.bf16.mxu0 0
    %412 = vmatpush1.bf16.msra.mxu0 %v393
    %413 = vmatprep.subr.bf16.mxu0 0
    %414 = vmatpush1.bf16.msra.mxu0 %v392
    %415 = vmatprep.subr.bf16.mxu0 0
    %416 = vmatpush1.bf16.msra.mxu0 %v391
    %417 = vmatprep.subr.bf16.mxu0 0
    %418 = vmatpush1.bf16.msra.mxu0 %v390
    %419 = vmatprep.subr.bf16.mxu0 0
    %420 = vmatpush1.bf16.msra.mxu0 %v389
    %421 = vmatprep.subr.bf16.mxu0 0
    %422 = vmatpush2.bf16.msra.mxu0 0
    %423 = vmatprep.subr.bf16.mxu0 0
    %424 = vmatpush2.bf16.msra.mxu0 0
    %425 = vmatprep.subr.bf16.mxu0 0
    %426 = vmatpush2.bf16.msra.mxu0 0
    %427 = vmatprep.subr.bf16.mxu0 0
    %428 = vmatpush2.bf16.msra.mxu0 0
    %429 = vmatprep.subr.bf16.mxu0 0
    %430 = vmatpush2.bf16.msra.mxu0 0
    %431 = vmatprep.subr.bf16.mxu0 0
    %432 = vmatpush2.bf16.msra.mxu0 0
    %433 = vmatprep.subr.bf16.mxu0 0
    %434 = vmatpush2.bf16.msra.mxu0 0
    %435 = vmatprep.subr.bf16.mxu0 0
    %436 = vmatpush2.bf16.msra.mxu0 0
    %437 = vmatprep.mubr.bf16.mxu0 0
    %438 = vmatmul.mubr.bf16.gmra.mxu0 %v330
    %v439 = vpop.f32.mrf.mxu0
    %v440 = vadd.f32 %v355, %v439
    %v441 = vpop.f32.mrf.mxu0
    %v442 = vpop.f32.mrf.mxu0
    %v443 = vadd.f32 %v355, %v442
    %v444 = vpop.f32.mrf.mxu0
    %445 = vmatprep.mubr.bf16.mxu0 0
    %446 = vmatmul.mubr.bf16.gmra.mxu0 %v331
    %v447 = vpop.f32.mrf.mxu0
    %v448 = vadd.f32 %v355, %v447
    %v449 = vpop.f32.mrf.mxu0
    %v450 = vpop.f32.mrf.mxu0
    %v451 = vadd.f32 %v355, %v450
    %v452 = vpop.f32.mrf.mxu0
    %453 = vmatprep.mubr.bf16.mxu0 0
    %454 = vmatmul.mubr.bf16.gmra.mxu0 %v332
    %v455 = vpop.f32.mrf.mxu0
    %v456 = vadd.f32 %v355, %v455
    %v457 = vpop.f32.mrf.mxu0
    %v458 = vpop.f32.mrf.mxu0
    %v459 = vadd.f32 %v355, %v458
    %v460 = vpop.f32.mrf.mxu0
    %461 = vmatprep.mubr.bf16.mxu0 0
    %462 = vmatmul.mubr.bf16.gmra.mxu0 %v333
    %v463 = vpop.f32.mrf.mxu0
    %v464 = vadd.f32 %v355, %v463
    %v465 = vpop.f32.mrf.mxu0
    %v466 = vpop.f32.mrf.mxu0
    %v467 = vadd.f32 %v355, %v466
    %v468 = vpop.f32.mrf.mxu0
    %469 = vdwg.mxu0
    %470 = vst [vmem:[#allocation7] sm:$0xff] %v440
    %471 = vst [vmem:[#allocation7 + $0x8] sm:$0xff] %v443
    %472 = vst [vmem:[#allocation7 + $0x10] sm:$0xff] %v448
    %473 = vst [vmem:[#allocation7 + $0x18] sm:$0xff] %v451
    %474 = vst [vmem:[#allocation7 + $0x20] sm:$0xff] %v456
    %475 = vst [vmem:[#allocation7 + $0x28] sm:$0xff] %v459
    %476 = vst [vmem:[#allocation7 + $0x30] sm:$0xff] %v464
    %477 = vst [vmem:[#allocation7 + $0x38] sm:$0xff] %v467
    // Predicated region
    $region38: #{tpu_custom_call.1} parent=1 // pred_check
      _
    $region39: #{tpu_custom_call.1} parent=1 // pred_check_branch
      %479 = sbr.rel (0) target = $region41
    $region40: #{tpu_custom_call.1} parent=1 // pred_region
      %s481 = ssub.s32 1024, 1024
      %482 = vsyncadd [#allocation4], %s481
      %s483 = sshll.u32 [#allocation7], 4
      %s484 = int_to_ptr.vmem [resolvable:$true] %s483
      %489 = dma.vmem_to_hbm [thread:$0]  %s484, 1024, %s7, [#allocation4], 128, 128, 8
    $region41: #{tpu_custom_call.1} parent=1 // pred_fallthru
      _
    // Predicated region
    $region42: #{tpu_custom_call.1} parent=1 // pred_check
      _
    $region43: #{tpu_custom_call.1} parent=1 // pred_check_branch
      %491 = sbr.rel (0) target = $region45
    $region44: #{tpu_custom_call.1} parent=1 // pred_region
      %492 = dma.done [#allocation4], 1024
    $region45: #{tpu_custom_call.1} parent=1 // pred_fallthru
      _
    %493 = vsyncpa [#allocation3], 1
    %494 = vsyncpa [#allocation6], 1
    %495 = vsyncpa [#allocation4], 1

</llo_original>
